<compile_context>
chip_gen: v7x
topology: tpu7x:2x2x1
jax: 0.10.0
libtpu: 0.0.40
codegen_flags: <defaults>
</compile_context>

<pallas_src>
import math
import functools

import jax
import jax.numpy as jnp
from jax.experimental import pallas as pl
from jax.experimental.pallas import tpu as pltpu

# Storage dtype for conv GEMM operands (accumulation is always f32).
# bf16 halves HBM/VMEM traffic on v6e/v7x; use jnp.float32 on v5e.
CONV_DTYPE = jnp.bfloat16
VMEM_LIMIT = 48 * 1024 * 1024


def _round_up(x, m):
    return ((x + m - 1) // m) * m


def _cparams(dims):
    return pltpu.CompilerParams(dimension_semantics=dims,
                                vmem_limit_bytes=VMEM_LIMIT)


# ----------------------------------------------------------------------------
# Tiled GEMM (bias fused)
# ----------------------------------------------------------------------------

def _matmul_kernel(x_ref, w_ref, b_ref, o_ref, acc_ref):
    @pl.when(pl.program_id(2) == 0)
    def _():
        acc_ref[...] = jnp.zeros_like(acc_ref)

    acc_ref[...] += jnp.dot(x_ref[...], w_ref[...],
                            preferred_element_type=jnp.float32)

    @pl.when(pl.program_id(2) == pl.num_programs(2) - 1)
    def _():
        o_ref[...] = (acc_ref[...] + b_ref[...].astype(jnp.float32)
                      ).astype(o_ref.dtype)


def pallas_matmul(x, w, b=None, out_dtype=jnp.float32):
    """(M,K)@(K,N)+b via a tiled, K-accumulating Pallas GEMM."""
    M, K = x.shape
    K2, N = w.shape
    assert K == K2
    if b is None:
        b = jnp.zeros((N,), jnp.float32)

    tm = 256 if M >= 256 else _round_up(M, 8)
    tn = 256 if N >= 256 else _round_up(N, 128)
    tk = 256 if K >= 256 else _round_up(K, 128)
    Mp, Kp, Np = _round_up(M, tm), _round_up(K, tk), _round_up(N, tn)

    xp = jnp.pad(x, ((0, Mp - M), (0, Kp - K)))
    wp = jnp.pad(w, ((0, Kp - K), (0, Np - N)))
    bp = jnp.pad(b.astype(jnp.float32), (0, Np - N)).reshape(1, Np)

    grid = (Mp // tm, Np // tn, Kp // tk)
    flops = 2 * M * N * K
    bytes_acc = int(x.size * x.dtype.itemsize + w.size * w.dtype.itemsize
                    + M * N * jnp.dtype(out_dtype).itemsize)

    out = pl.pallas_call(
        _matmul_kernel,
        grid=grid,
        in_specs=[
            pl.BlockSpec((tm, tk), lambda i, j, k: (i, k)),
            pl.BlockSpec((tk, tn), lambda i, j, k: (k, j)),
            pl.BlockSpec((1, tn), lambda i, j, k: (0, j)),
        ],
        out_specs=pl.BlockSpec((tm, tn), lambda i, j, k: (i, j)),
        out_shape=jax.ShapeDtypeStruct((Mp, Np), out_dtype),
        scratch_shapes=[pltpu.VMEM((tm, tn), jnp.float32)],
        compiler_params=_cparams(("parallel", "parallel", "arbitrary")),
        cost_estimate=pl.CostEstimate(flops=flops, transcendentals=0,
                                      bytes_accessed=bytes_acc),
    )(xp, wp, bp)
    return out[:M, :N]


# ----------------------------------------------------------------------------
# Tiled per-row normalization (two pass: stats + apply) with optional LeakyReLU
# ----------------------------------------------------------------------------

def _rowstats_kernel(x_ref, s_ref, ss_ref, acc_s, acc_ss):
    c = pl.program_id(0)

    @pl.when(c == 0)
    def _():
        acc_s[...] = jnp.zeros_like(acc_s)
        acc_ss[...] = jnp.zeros_like(acc_ss)

    x = x_ref[...].astype(jnp.float32)
    acc_s[...] += jnp.sum(x, axis=-1, keepdims=True)
    acc_ss[...] += jnp.sum(x * x, axis=-1, keepdims=True)

    @pl.when(c == pl.num_programs(0) - 1)
    def _():
        s_ref[...] = jnp.broadcast_to(acc_s[...], s_ref.shape)
        ss_ref[...] = jnp.broadcast_to(acc_ss[...], ss_ref.shape)


def _rowapply_kernel(x_ref, mu_ref, rs_ref, o_ref, *, leaky):
    x = x_ref[...].astype(jnp.float32)
    y = (x - mu_ref[...]) * rs_ref[...]
    if leaky:
        y = jnp.where(y > 0, y, 0.01 * y)      # LeakyReLU(0.01)
    o_ref[...] = y


def pallas_rownorm(x2d, leaky=False, eps=1e-5):
    """Per-row zero-mean / unit-var normalization, tiled over columns."""
    R, C = x2d.shape
    target = max(128, (1 << 20) // (4 * R))                 # ~1 MB blocks
    tc = min(_round_up(C, 128), _round_up(target, 128))
    Cp = _round_up(C, tc)
    xp = jnp.pad(x2d, ((0, 0), (0, Cp - C)))
    n_ct = Cp // tc

    s, ss = pl.pallas_call(
        _rowstats_kernel,
        grid=(n_ct,),
        in_specs=[pl.BlockSpec((R, tc), lambda c: (0, c))],
        out_specs=[pl.BlockSpec((R, 128), lambda c: (0, 0)),
                   pl.BlockSpec((R, 128), lambda c: (0, 0))],
        out_shape=[jax.ShapeDtypeStruct((R, 128), jnp.float32),
                   jax.ShapeDtypeStruct((R, 128), jnp.float32)],
        scratch_shapes=[pltpu.VMEM((R, 1), jnp.float32),
                        pltpu.VMEM((R, 1), jnp.float32)],
        compiler_params=_cparams(("arbitrary",)),
    )(xp)

    s = s[:, :1]
    ss = ss[:, :1]
    mu = s / C
    var = jnp.maximum(ss / C - mu * mu, 0.0)
    rstd = jax.lax.rsqrt(var + eps)

    out = pl.pallas_call(
        functools.partial(_rowapply_kernel, leaky=leaky),
        grid=(n_ct,),
        in_specs=[pl.BlockSpec((R, tc), lambda c: (0, c)),
                  pl.BlockSpec((R, 1), lambda c: (0, 0)),
                  pl.BlockSpec((R, 1), lambda c: (0, 0))],
        out_specs=pl.BlockSpec((R, tc), lambda c: (0, c)),
        out_shape=jax.ShapeDtypeStruct((R, Cp), jnp.float32),
        compiler_params=_cparams(("parallel",)),
    )(xp, mu, rstd)
    return out[:, :C]


# ----------------------------------------------------------------------------
# Tiled per-COLUMN normalization on NHWC (per-channel spatial norm) — avoids
# the NHWC<->NCHW transposes through HBM.
# ----------------------------------------------------------------------------

def _colstats_kernel(x_ref, s_ref, ss_ref, acc_s, acc_ss):
    r = pl.program_id(1)

    @pl.when(r == 0)
    def _():
        acc_s[...] = jnp.zeros_like(acc_s)
        acc_ss[...] = jnp.zeros_like(acc_ss)

    x = x_ref[0].astype(jnp.float32)                 # (tr, C)
    acc_s[...] += jnp.sum(x, axis=0, keepdims=True)
    acc_ss[...] += jnp.sum(x * x, axis=0, keepdims=True)

    @pl.when(r == pl.num_programs(1) - 1)
    def _():
        s_ref[0] = jnp.broadcast_to(acc_s[...], s_ref.shape[1:])
        ss_ref[0] = jnp.broadcast_to(acc_ss[...], ss_ref.shape[1:])


def _colapply_kernel(x_ref, mu_ref, rs_ref, o_ref):
    o_ref[0] = (x_ref[0].astype(jnp.float32) - mu_ref[0]) * rs_ref[0]


def pallas_colnorm_nhwc(x, eps=1e-5):
    """Per-(batch, channel) zero-mean / unit-var norm over the spatial dims,
    computed directly on NHWC (channels stay in lanes; rows are tiled)."""
    B, H, W, C = x.shape
    R = H * W
    xf = x.reshape(B, R, C)

    # ~2 MB row tiles.
    tr = max(8, min(_round_up(R, 8), _round_up((2 << 20) // (4 * C), 8)))
    Rp = _round_up(R, tr)
    xp = jnp.pad(xf, ((0, 0), (0, Rp - R), (0, 0)))
    n_rt = Rp // tr

    s, ss = pl.pallas_call(
        _colstats_kernel,
        grid=(B, n_rt),
        in_specs=[pl.BlockSpec((1, tr, C), lambda b, r: (b, r, 0))],
        out_specs=[pl.BlockSpec((1, 8, C), lambda b, r: (b, 0, 0)),
                   pl.BlockSpec((1, 8, C), lambda b, r: (b, 0, 0))],
        out_shape=[jax.ShapeDtypeStruct((B, 8, C), jnp.float32),
                   jax.ShapeDtypeStruct((B, 8, C), jnp.float32)],
        scratch_shapes=[pltpu.VMEM((1, C), jnp.float32),
                        pltpu.VMEM((1, C), jnp.float32)],
        compiler_params=_cparams(("arbitrary", "arbitrary")),
    )(xp)

    s = s[:, :1, :]                                   # (B, 1, C)
    ss = ss[:, :1, :]
    mu = s / R
    var = jnp.maximum(ss / R - mu * mu, 0.0)
    rstd = jax.lax.rsqrt(var + eps)

    out = pl.pallas_call(
        _colapply_kernel,
        grid=(B, n_rt),
        in_specs=[pl.BlockSpec((1, tr, C), lambda b, r: (b, r, 0)),
                  pl.BlockSpec((1, 1, C), lambda b, r: (b, 0, 0)),
                  pl.BlockSpec((1, 1, C), lambda b, r: (b, 0, 0))],
        out_specs=pl.BlockSpec((1, tr, C), lambda b, r: (b, r, 0)),
        out_shape=jax.ShapeDtypeStruct((B, Rp, C), jnp.float32),
        compiler_params=_cparams(("parallel", "parallel")),
    )(xp, mu, rstd)
    return out[:, :R, :].reshape(B, H, W, C)


# ----------------------------------------------------------------------------
# Direct (no-im2col) stride-1 convolution with fused residual
# ----------------------------------------------------------------------------

def _conv_direct_kernel(xa_ref, xb_ref, w_ref, b_ref, *rest, k, with_res):
    if with_res:
        res_ref, o_ref = rest
    else:
        (o_ref,) = rest
    TR, Wo, Cout = o_ref.shape[1], o_ref.shape[2], o_ref.shape[3]
    xcat = jnp.concatenate([xa_ref[0], xb_ref[0]], axis=0)   # (2*TR, Wp, Cin)
    Cin = xcat.shape[-1]
    acc = jnp.zeros((TR * Wo, Cout), jnp.float32)
    for t in range(k * k):
        i, j = t // k, t % k
        xt = xcat[i:i + TR, j:j + Wo, :].reshape(TR * Wo, Cin)
        acc = acc + jnp.dot(xt, w_ref[t], preferred_element_type=jnp.float32)
    out = (acc + b_ref[...].astype(jnp.float32)).reshape(TR, Wo, Cout)
    if with_res:
        out = out + res_ref[0].astype(jnp.float32)
    o_ref[0] = out.astype(o_ref.dtype)


def _pick_row_tile(Ho, Wp, Wo, Cin, Cout, k, esize):
    budget = 20 * 1024 * 1024
    for tr in (256, 128, 64, 32, 16, 8):
        if Ho % tr != 0:
            continue
        inbytes = 2 * 2 * tr * Wp * Cin * esize      # 2 specs x 2 buffers
        outbytes = 2 * tr * Wo * Cout * 4
        accbytes = 2 * tr * Wo * Cout * 4
        wbytes = k * k * Cin * Cout * esize
        if inbytes + outbytes + accbytes + wbytes <= budget:
            return tr
    return None


def _conv_direct(x, cp, k, pad, tr, residual):
    B, H, W, Cin = x.shape
    Cout = cp['w'].shape[1]
    Ho, Wo = H, W                     # stride 1, 'same' padding
    Wp = W + 2 * pad
    n_rb = Ho // tr
    Hp_ext = (n_rb + 1) * tr          # room for the halo (next) row block
    esize = jnp.dtype(CONV_DTYPE).itemsize

    xpd = jnp.pad(x.astype(CONV_DTYPE),
                  ((0, 0), (pad, Hp_ext - H - pad), (pad, pad), (0, 0)))
    w = cp['w'].reshape(k * k, Cin, Cout).astype(CONV_DTYPE)
    b = cp['b'].astype(jnp.float32).reshape(1, Cout)
    with_res = residual is not None

    in_specs = [
        pl.BlockSpec((1, tr, Wp, Cin), lambda bb, r: (bb, r, 0, 0)),
        pl.BlockSpec((1, tr, Wp, Cin), lambda bb, r: (bb, r + 1, 0, 0)),
        pl.BlockSpec((k * k, Cin, Cout), lambda bb, r: (0, 0, 0)),
        pl.BlockSpec((1, Cout), lambda bb, r: (0, 0)),
    ]
    args = [xpd, xpd, w, b]
    if with_res:
        in_specs.append(pl.BlockSpec((1, tr, Wo, Cout),
                                     lambda bb, r: (bb, r, 0, 0)))
        args.append(residual)

    flops = 2 * B * Ho * Wo * Cin * Cout * k * k
    bytes_acc = int(xpd.size * esize + w.size * esize
                    + B * Ho * Wo * Cout * 4
                    + (residual.size * 4 if with_res else 0))

    return pl.pallas_call(
        functools.partial(_conv_direct_kernel, k=k, with_res=with_res),
        grid=(B, n_rb),
        in_specs=in_specs,
        out_specs=pl.BlockSpec((1, tr, Wo, Cout), lambda bb, r: (bb, r, 0, 0)),
        out_shape=jax.ShapeDtypeStruct((B, Ho, Wo, Cout), jnp.float32),
        compiler_params=_cparams(("parallel", "parallel")),
        cost_estimate=pl.CostEstimate(flops=flops, transcendentals=0,
                                      bytes_accessed=bytes_acc),
    )(*args)


def conv2d_nhwc(x, cp, k, stride, pad, residual=None):
    """Conv2d on NHWC.  1x1 -> plain tiled GEMM; stride-1 & Cin>=8 -> direct
    tap-accumulation kernel (no im2col); otherwise im2col + tiled GEMM."""
    B, H, W, Cin = x.shape
    Cout = cp['w'].shape[1]

    if k == 1 and stride == 1 and pad == 0:
        out = pallas_matmul(x.reshape(B * H * W, Cin).astype(CONV_DTYPE),
                            cp['w'].astype(CONV_DTYPE), cp['b'])
        out = out.reshape(B, H, W, Cout)
        return out if residual is None else out + residual

    Ho = (H + 2 * pad - k) // stride + 1
    Wo = (W + 2 * pad - k) // stride + 1

    if (stride == 1 and Cin >= 8 and Ho == H and Wo == W and Wo % 8 == 0):
        tr = _pick_row_tile(Ho, W + 2 * pad, Wo, Cin, Cout, k,
                            jnp.dtype(CONV_DTYPE).itemsize)
        if tr is not None:
            return _conv_direct(x, cp, k, pad, tr, residual)

    # im2col fallback (only Cin==1 and the strided 5x5 convs land here, where
    # the blowup is small in absolute bytes).
    xpd = jnp.pad(x, ((0, 0), (pad, pad), (pad, pad), (0, 0)))
    taps = []
    for i in range(k):
        for j in range(k):
            taps.append(xpd[:, i:i + stride * (Ho - 1) + 1:stride,
                            j:j + stride * (Wo - 1) + 1:stride, :])
    patches = jnp.concatenate(taps, axis=-1).reshape(B * Ho * Wo, k * k * Cin)
    out = pallas_matmul(patches.astype(CONV_DTYPE),
                        cp['w'].astype(CONV_DTYPE), cp['b'])
    out = out.reshape(B, Ho, Wo, Cout)
    return out if residual is None else out + residual


# ----------------------------------------------------------------------------
# Fused multi-head attention (pos projections + qkv + attn + out proj + resid)
# ----------------------------------------------------------------------------

def _mha_kernel(x_ref, xp_ref, y_ref, yp_ref,
                wqp_ref, bqp_ref, wkp_ref, bkp_ref,
                wq_ref, bq_ref, wk_ref, bk_ref,
                wv_ref, bv_ref, wo_ref, bo_ref,
                o_ref, *, n_heads):
    x = x_ref[...].astype(jnp.float32)            # (tq, D) query tokens
    y = y_ref[...].astype(jnp.float32)            # (Nk, D) key/value tokens

    # position-conditioned q/k (v takes no positional term)
    qin = x + jnp.dot(xp_ref[...], wqp_ref[...],
                      preferred_element_type=jnp.float32) + bqp_ref[...]
    kin = y + jnp.dot(yp_ref[...], wkp_ref[...],
                      preferred_element_type=jnp.float32) + bkp_ref[...]

    q = jnp.dot(qin, wq_ref[...], preferred_element_type=jnp.float32) + bq_ref[...]
    k = jnp.dot(kin, wk_ref[...], preferred_element_type=jnp.float32) + bk_ref[...]
    v = jnp.dot(y, wv_ref[...], preferred_element_type=jnp.float32) + bv_ref[...]

    D = q.shape[-1]
    Dh = D // n_heads
    scale = 1.0 / math.sqrt(Dh)

    ctxs = []
    for h in range(n_heads):
        sl = slice(h * Dh, (h + 1) * Dh)
        qh, kh, vh = q[:, sl], k[:, sl], v[:, sl]
        s = jax.lax.dot_general(qh, kh, (((1,), (1,)), ((), ())),
                                preferred_element_type=jnp.float32) * scale
        s = s - jnp.max(s, axis=-1, keepdims=True)
        e = jnp.exp(s)
        p = e * pl.reciprocal(jnp.sum(e, axis=-1, keepdims=True), approx=True)
        ctxs.append(jnp.dot(p, vh, preferred_element_type=jnp.float32))
    ctx = jnp.concatenate(ctxs, axis=-1)          # (tq, D)

    out = jnp.dot(ctx, wo_ref[...], preferred_element_type=jnp.float32) + bo_ref[...]
    o_ref[...] = x + out                           # residual


def pallas_mha(x, xpos, y, ypos, p, n_heads, qpos_key='pos', kpos_key=None):
    Nq, D = x.shape
    kpos_key = kpos_key or qpos_key

    tq = 256 if Nq >= 256 else _round_up(Nq, 8)
    Nqp = _round_up(Nq, tq)
    xq = jnp.pad(x, ((0, Nqp - Nq), (0, 0)))
    xpp = jnp.pad(xpos, ((0, Nqp - Nq), (0, 0)))

    wargs = (p[qpos_key]['w'], p[qpos_key]['b'].reshape(1, D),
             p[kpos_key]['w'], p[kpos_key]['b'].reshape(1, D),
             p['wq']['w'], p['wq']['b'].reshape(1, D),
             p['wk']['w'], p['wk']['b'].reshape(1, D),
             p['wv']['w'], p['wv']['b'].reshape(1, D),
             p['wo']['w'], p['wo']['b'].reshape(1, D))

    def full(a):
        return pl.BlockSpec(a.shape, lambda i: (0,) * a.ndim)

    in_specs = ([pl.BlockSpec((tq, D), lambda i: (i, 0)),
                 pl.BlockSpec((tq, 2), lambda i: (i, 0)),
                 full(y), full(ypos)]
                + [full(a) for a in wargs])

    out = pl.pallas_call(
        functools.partial(_mha_kernel, n_heads=n_heads),
        grid=(Nqp // tq,),
        in_specs=in_specs,
        out_specs=pl.BlockSpec((tq, D), lambda i: (i, 0)),
        out_shape=jax.ShapeDtypeStruct((Nqp, D), jnp.float32),
        compiler_params=_cparams(("parallel",)),
    )(xq, xpp, y, ypos, *wargs)
    return out[:Nq]


# ----------------------------------------------------------------------------
# Fused output head: LayerNorm -> Linear -> Softplus -> Linear -> Softplus ->
# Linear(2, lane-padded to 128) [-> tanh]
# ----------------------------------------------------------------------------

def _head_kernel(x_ref, g_ref, be_ref, w1_ref, b1_ref, w2_ref, b2_ref,
                 w3_ref, b3_ref, o_ref, *, tanh):
    x = x_ref[...].astype(jnp.float32)
    mu = jnp.mean(x, axis=-1, keepdims=True)
    var = jnp.mean((x - mu) ** 2, axis=-1, keepdims=True)
    xn = (x - mu) * jax.lax.rsqrt(var + 1e-5)
    xn = xn * g_ref[...] + be_ref[...]
    h = jnp.dot(xn, w1_ref[...], preferred_element_type=jnp.float32) + b1_ref[...]
    h = jax.nn.softplus(h)
    h = jnp.dot(h, w2_ref[...], preferred_element_type=jnp.float32) + b2_ref[...]
    h = jax.nn.softplus(h)
    out = jnp.dot(h, w3_ref[...], preferred_element_type=jnp.float32) + b3_ref[...]
    if tanh:
        out = jnp.tanh(out)
    o_ref[...] = out


def pallas_head(x, p, *, tanh):
    N, D = x.shape
    OUTP = 128                     # lane-dense padded output width (true: 2)
    w3 = jnp.pad(p['l3']['w'], ((0, 0), (0, OUTP - p['l3']['w'].shape[1])))
    b3 = jnp.pad(p['l3']['b'], (0, OUTP - p['l3']['b'].shape[0])).reshape(1, OUTP)
    args = (x, p['gamma'].reshape(1, D), p['beta'].reshape(1, D),
            p['l1']['w'], p['l1']['b'].reshape(1, D),
            p['l2']['w'], p['l2']['b'].reshape(1, D),
            w3, b3)

    def full(a):
        return pl.BlockSpec(a.shape, lambda i: (0,) * a.ndim)

    out = pl.pallas_call(
        functools.partial(_head_kernel, tanh=tanh),
        grid=(1,),
        in_specs=[full(a) for a in args],
        out_specs=pl.BlockSpec((N, OUTP), lambda i: (0, 0)),
        out_shape=jax.ShapeDtypeStruct((N, OUTP), jnp.float32),
        compiler_params=_cparams(("arbitrary",)),
    )(*args)
    return out[:, :2]


# ----------------------------------------------------------------------------
# Module glue (patching, gathers, transposes) in plain JAX
# ----------------------------------------------------------------------------

def spatial_contrast_norm(x):
    # TODO(synk): SpatialContrastNorm reference not provided (local contrast
    # with kernel (H//8, W//8)); approximated with global per-channel spatial
    # zero-mean / unit-variance normalization.
    B, H, W, C = x.shape
    if C == 1:
        return pallas_rownorm(x.reshape(B, H * W), leaky=False).reshape(x.shape)
    # per-channel spatial norm computed directly on NHWC (no HBM transposes)
    return pallas_colnorm_nhwc(x)


def group_norm_lrelu(x):
    """GroupNorm(1, C, affine=False) + LeakyReLU, tiled reduction."""
    B = x.shape[0]
    return pallas_rownorm(x.reshape(B, -1), leaky=True).reshape(x.shape)


def cnn_block(x, p, k, stride, pad):
    xn = spatial_contrast_norm(x)
    res = conv2d_nhwc(xn, p['res'], k, stride, pad)
    h = conv2d_nhwc(xn, p['c0'], k, stride, pad)
    h = group_norm_lrelu(h)
    h = conv2d_nhwc(h, p['c1'], 1, 1, 0)
    h = group_norm_lrelu(h)
    # residual add fused into the final 3x3 conv kernel
    return conv2d_nhwc(h, p['c2'], 3, 1, 1, residual=res)


def shape_embedding(points, template_n, feat, p, alpha):
    # TODO(synk): ObjectShapeEmbedding reference not provided; approximated
    # with nearest-neighbour feature sampling at the object points plus a
    # linear positional embedding of the template (fused into one GEMM).
    B, Hf, Wf, C = feat.shape
    pts = points[0]                                # (N, 2) pixel coords
    pn = -1.0 + pts / (511.0 / 2.0)
    ix = jnp.clip(jnp.round((pn[:, 0] + 1.0) * 0.5 * (Wf - 1)), 0, Wf - 1).astype(jnp.int32)
    iy = jnp.clip(jnp.round((pn[:, 1] + 1.0) * 0.5 * (Hf - 1)), 0, Hf - 1).astype(jnp.int32)
    sampled = feat[0][iy, ix, :]                   # (N, C) gather (JAX glue)
    xin = jnp.concatenate([sampled, alpha * template_n[0]], axis=-1)
    w = jnp.concatenate([p['feat']['w'], p['pos']['w']], axis=0)
    b = p['feat']['b'] + p['pos']['b']
    return pallas_matmul(xin, w, b)


def shape_self_attn_layer(x, tmpl, p, alpha, n_heads):
    # TODO(synk): ShapeSelfAttentionLayer reference not provided; approximated
    # with position-conditioned MHA self-attention + residual (fused kernel).
    pos = alpha * tmpl
    return pallas_mha(x, pos, x, pos, p, n_heads, qpos_key='pos'), None


def shape_to_image_attn_layer(x, xp_, y, yp, p, alpha, n_heads):
    # TODO(synk): ShapeToImageAttentionLayer reference not provided; approximated
    # with position-conditioned MHA cross-attention (shape query -> image kv).
    return pallas_mha(x, alpha * xp_, y, alpha * yp, p, n_heads,
                      qpos_key='qpos', kpos_key='kpos'), None


def image_self_attention(feat, p, patch_size, n_heads, n_layers, alpha):
    # TODO(synk): ImageSelfAttention reference not provided; approximated with
    # patch embedding + n_layers of position-conditioned MHA self-attention.
    B, Hf, Wf, C = feat.shape
    ps = patch_size
    nh, nw = Hf // ps, Wf // ps
    patches = feat[0].reshape(nh, ps, nw, ps, C).transpose(0, 2, 1, 3, 4)
    patches = patches.reshape(nh * nw, ps * ps * C)
    y = pallas_matmul(patches, p['embed']['w'], p['embed']['b'])
    cy = (jnp.arange(nh, dtype=jnp.float32) + 0.5) * ps / Hf * 2.0 - 1.0
    cx = (jnp.arange(nw, dtype=jnp.float32) + 0.5) * ps / Wf * 2.0 - 1.0
    gy, gx = jnp.meshgrid(cy, cx, indexing='ij')
    yp = jnp.stack([gx, gy], axis=-1).reshape(nh * nw, 2)
    y_list = []
    for lp in p['layers']:
        y = pallas_mha(y, alpha * yp, y, alpha * yp, lp, n_heads, qpos_key='pos')
        y_list.append(y)
    return y_list, [None] * n_layers, yp


# ----------------------------------------------------------------------------
# TransDeformer forward
# ----------------------------------------------------------------------------

def trans_deformer_forward(params, arg, obj_init, template, img_nchw):
    nL = arg['n_layers']
    nH = arg['n_heads']
    alpha = arg['alpha']

    img = jnp.transpose(img_nchw, (0, 2, 3, 1))                    # NCHW -> NHWC
    feat512 = cnn_block(img, params['layer0'], k=5, stride=1, pad=2)
    feat128 = cnn_block(feat512, params['layer1'], k=5, stride=4, pad=2)

    template_n = -1.0 + template / (511.0 / 2.0)
    tmpl = template_n[0]                                           # (N, 2)

    x0 = shape_embedding(obj_init, template_n, feat128, params['shape_emb'], alpha)
    xp_ = (-1.0 + obj_init / (511.0 / 2.0))[0]                     # (N, 2)

    x1 = x0
    x1, _ = shape_self_attn_layer(x1, tmpl, params['shape_self_attn'][nL + 1], alpha, nH)
    x1, _ = shape_self_attn_layer(x1, tmpl, params['shape_self_attn'][nL], alpha, nH)

    y_list, _, yp = image_self_attention(feat128, params['img_attn'],
                                         arg['patch_size'], nH, nL, alpha)

    x2 = x1
    for n in range(nL - 1, 0, -1):
        x2, _ = shape_to_image_attn_layer(x2, xp_, y_list[n], yp,
                                          params['shape_to_img'][n], alpha, nH)
        x2, _ = shape_self_attn_layer(x2, tmpl, params['shape_self_attn'][n], alpha, nH)

    u0 = pallas_head(x2, params['out'], tanh=False)                # (N, 2)
    obj0 = obj_init + u0[None]

    x3 = shape_embedding(jax.lax.stop_gradient(obj0), template_n, feat512,
                         params['shape_emb1'], alpha)
    for n in range(nL):
        x3, _ = shape_self_attn_layer(x3, tmpl, params['shape_self_attn1'][n], alpha, nH)

    u1 = 2.0 * pallas_head(x3, params['out1'], tanh=True)
    obj1 = obj0 + u1[None]
    return obj0, obj1


# ----------------------------------------------------------------------------
# Deterministic parameter init (synthetic, not a checkpoint load)
# ----------------------------------------------------------------------------
# NOTE: conv weights are laid out for im2col GEMM as (k*k*Cin, Cout) with tap
# ordering (kh, kw, Cin); loading real PyTorch (Cout, Cin, kh, kw) weights
# would require a permutation.

def init_params(key, arg):
    D = arg['embed_dim']
    nL = arg['n_layers']
    ps = arg['patch_size']
    keys = iter(jax.random.split(key, 512))

    def nrm(shape, scale=0.05):
        return jax.random.normal(next(keys), shape, jnp.float32) * scale

    def dense(din, dout):
        return {'w': nrm((din, dout)), 'b': nrm((dout,))}

    def conv(cin, cout, k):
        return {'w': nrm((k * k * cin, cout)), 'b': nrm((cout,))}

    def cnn_block_p(cin, cout, k):
        hid = 2 * max(cin, cout)
        return {'c0': conv(cin, hid, k), 'c1': conv(hid, hid, 1),
                'c2': conv(hid, cout, 3), 'res': conv(cin, cout, k)}

    def mha(pos_names=('pos',)):
        p = {'wq': dense(D, D), 'wk': dense(D, D),
             'wv': dense(D, D), 'wo': dense(D, D)}
        for name in pos_names:
            p[name] = dense(2, D)
        return p

    def head():
        return {'gamma': jnp.ones((D,), jnp.float32),
                'beta': jnp.zeros((D,), jnp.float32),
                'l1': dense(D, D), 'l2': dense(D, D), 'l3': dense(D, 2)}

    return {
        'layer0': cnn_block_p(1, 32, 5),
        'layer1': cnn_block_p(32, 128, 5),
        'shape_emb': {'feat': dense(128, D), 'pos': dense(2, D)},
        'shape_emb1': {'feat': dense(32, D), 'pos': dense(2, D)},
        'shape_self_attn': [mha() for _ in range(nL + 2)],
        'shape_self_attn1': [mha() for _ in range(nL)],
        'shape_to_img': [mha(pos_names=('qpos', 'kpos')) for _ in range(nL)],
        'img_attn': {'embed': dense(ps * ps * 128, D),
                     'layers': [mha() for _ in range(nL)]},
        'out': head(),
        'out1': head(),
    }


# ----------------------------------------------------------------------------

if __name__ == "__main__":
    arg = {'n_layers': 2, 'n_heads': 4, 'embed_dim': 32,
           'alpha': 1.0, 'attn_drop': 0.0, 'patch_size': 4}

    key = jax.random.PRNGKey(0)
    kp, k1, k2, k3 = jax.random.split(key, 4)
    params = init_params(kp, arg)

    # Small shapes consistent with the module (original is 512x512, 1-channel):
    # img (B=1, C=1, 32, 32) -> feat512-analog 32x32x32, feat128-analog 8x8x128.
    img = jax.random.normal(k1, (1, 1, 32, 32), jnp.float32)
    obj_init = jax.random.uniform(k2, (1, 8, 2), jnp.float32, 0.0, 511.0)
    template = jax.random.uniform(k3, (1, 8, 2), jnp.float32, 0.0, 511.0)

    obj0, obj1 = trans_deformer_forward(params, arg, obj_init, template, img)
    jax.block_until_ready((obj0, obj1))

    assert obj0.shape == (1, 8, 2) and obj1.shape == (1, 8, 2)
    assert obj0.dtype == jnp.float32 and obj1.dtype == jnp.float32
    print("KERNEL_OK")
</pallas_src>

<mosaic_0001>
module attributes {stable_mosaic.version = 11 : i64} {
  func.func @_rowstats_kernel(%arg0: i32, %arg1: memref<1x1024xf32, #tpu.memory_space<vmem>>, %arg2: memref<1x128xf32, #tpu.memory_space<vmem>>, %arg3: memref<1x128xf32, #tpu.memory_space<vmem>>, %arg4: memref<1x1xf32, #tpu.memory_space<vmem>>, %arg5: memref<1x1xf32, #tpu.memory_space<vmem>>) attributes {dimension_semantics = [#tpu.dimension_semantics<arbitrary>], iteration_bounds = array<i64: 1>, scalar_prefetch = 0 : i64, scratch_operands = 2 : i64, tpu.core_type = #tpu.core_type<tc>, window_params = [{transform_indices = @transform_0, window_bounds = array<i64: 1, 1024>}, {pipeline_mode = #tpu.pipeline_mode<synchronous>, transform_indices = @transform_1, window_bounds = array<i64: 1, 128>}, {pipeline_mode = #tpu.pipeline_mode<synchronous>, transform_indices = @transform_2, window_bounds = array<i64: 1, 128>}]} {
    %c0_i32 = arith.constant 0 : i32
    %0 = arith.cmpi eq, %arg0, %c0_i32 : i32
    %1 = arith.extui %0 : i1 to i32
    %c0_i32_0 = arith.constant 0 : i32
    %2 = arith.cmpi ne, %1, %c0_i32_0 : i32
    scf.if %2 {
      %cst_13 = arith.constant 0.000000e+00 : f32
      %18 = vector.broadcast %cst_13 : f32 to vector<1x1xf32>
      %c0_14 = arith.constant 0 : index
      %c0_15 = arith.constant 0 : index
      %19 = vector.load %arg4[%c0_14, %c0_15] : memref<1x1xf32, #tpu.memory_space<vmem>>, vector<1x1xf32>
      tpu.vector_store %arg4[%c0_14, %c0_15], %18 {strides = array<i32>} : memref<1x1xf32, #tpu.memory_space<vmem>>, vector<1x1xf32>,
      %cst_16 = arith.constant 0.000000e+00 : f32
      %20 = vector.broadcast %cst_16 : f32 to vector<1x1xf32>
      %c0_17 = arith.constant 0 : index
      %c0_18 = arith.constant 0 : index
      %21 = vector.load %arg5[%c0_17, %c0_18] : memref<1x1xf32, #tpu.memory_space<vmem>>, vector<1x1xf32>
      tpu.vector_store %arg5[%c0_17, %c0_18], %20 {strides = array<i32>} : memref<1x1xf32, #tpu.memory_space<vmem>>, vector<1x1xf32>,
    } else {
    }
    %c0 = arith.constant 0 : index
    %c0_1 = arith.constant 0 : index
    %3 = vector.load %arg1[%c0, %c0_1] : memref<1x1024xf32, #tpu.memory_space<vmem>>, vector<1x1024xf32>
    %c0_2 = arith.constant 0 : index
    %c0_3 = arith.constant 0 : index
    %4 = vector.load %arg4[%c0_2, %c0_3] : memref<1x1xf32, #tpu.memory_space<vmem>>, vector<1x1xf32>
    %cst = arith.constant dense<0.000000e+00> : vector<1xf32>
    %5 = vector.multi_reduction <add>, %3, %cst [1] : vector<1x1024xf32> to vector<1xf32>
    %6 = vector.shape_cast %5 : vector<1xf32> to vector<1x1xf32>
    %7 = arith.addf %4, %6 : vector<1x1xf32>
    %c0_4 = arith.constant 0 : index
    %c0_5 = arith.constant 0 : index
    %8 = vector.load %arg4[%c0_4, %c0_5] : memref<1x1xf32, #tpu.memory_space<vmem>>, vector<1x1xf32>
    tpu.vector_store %arg4[%c0_4, %c0_5], %7 {strides = array<i32>} : memref<1x1xf32, #tpu.memory_space<vmem>>, vector<1x1xf32>,
    %c0_6 = arith.constant 0 : index
    %c0_7 = arith.constant 0 : index
    %9 = vector.load %arg5[%c0_6, %c0_7] : memref<1x1xf32, #tpu.memory_space<vmem>>, vector<1x1xf32>
    %10 = arith.mulf %3, %3 : vector<1x1024xf32>
    %cst_8 = arith.constant dense<0.000000e+00> : vector<1xf32>
    %11 = vector.multi_reduction <add>, %10, %cst_8 [1] : vector<1x1024xf32> to vector<1xf32>
    %12 = vector.shape_cast %11 : vector<1xf32> to vector<1x1xf32>
    %13 = arith.addf %9, %12 : vector<1x1xf32>
    %c0_9 = arith.constant 0 : index
    %c0_10 = arith.constant 0 : index
    %14 = vector.load %arg5[%c0_9, %c0_10] : memref<1x1xf32, #tpu.memory_space<vmem>>, vector<1x1xf32>
    tpu.vector_store %arg5[%c0_9, %c0_10], %13 {strides = array<i32>} : memref<1x1xf32, #tpu.memory_space<vmem>>, vector<1x1xf32>,
    %c0_i32_11 = arith.constant 0 : i32
    %15 = arith.cmpi eq, %arg0, %c0_i32_11 : i32
    %16 = arith.extui %15 : i1 to i32
    %c0_i32_12 = arith.constant 0 : i32
    %17 = arith.cmpi ne, %16, %c0_i32_12 : i32
    scf.if %17 {
      %c0_13 = arith.constant 0 : index
      %c0_14 = arith.constant 0 : index
      %18 = vector.load %arg4[%c0_13, %c0_14] : memref<1x1xf32, #tpu.memory_space<vmem>>, vector<1x1xf32>
      %19 = vector.shape_cast %18 : vector<1x1xf32> to vector<1x1xf32>
      %20 = vector.broadcast %19 : vector<1x1xf32> to vector<1x128xf32>
      %c0_15 = arith.constant 0 : index
      %c0_16 = arith.constant 0 : index
      %21 = vector.load %arg2[%c0_15, %c0_16] : memref<1x128xf32, #tpu.memory_space<vmem>>, vector<1x128xf32>
      tpu.vector_store %arg2[%c0_15, %c0_16], %20 {strides = array<i32>} : memref<1x128xf32, #tpu.memory_space<vmem>>, vector<1x128xf32>,
      %c0_17 = arith.constant 0 : index
      %c0_18 = arith.constant 0 : index
      %22 = vector.load %arg5[%c0_17, %c0_18] : memref<1x1xf32, #tpu.memory_space<vmem>>, vector<1x1xf32>
      %23 = vector.shape_cast %22 : vector<1x1xf32> to vector<1x1xf32>
      %24 = vector.broadcast %23 : vector<1x1xf32> to vector<1x128xf32>
      %c0_19 = arith.constant 0 : index
      %c0_20 = arith.constant 0 : index
      %25 = vector.load %arg3[%c0_19, %c0_20] : memref<1x128xf32, #tpu.memory_space<vmem>>, vector<1x128xf32>
      tpu.vector_store %arg3[%c0_19, %c0_20], %24 {strides = array<i32>} : memref<1x128xf32, #tpu.memory_space<vmem>>, vector<1x128xf32>,
    } else {
    }
    return
  }
  func.func @transform_0(%arg0: i32) -> (i32, i32) {
    %c0_i32 = arith.constant 0 : i32
    %c0_i32_0 = arith.constant 0 : i32
    return %c0_i32, %arg0 : i32, i32
  }
  func.func @transform_1(%arg0: i32) -> (i32, i32) {
    %c0_i32 = arith.constant 0 : i32
    %c0_i32_0 = arith.constant 0 : i32
    %c0_i32_1 = arith.constant 0 : i32
    return %c0_i32, %c0_i32_0 : i32, i32
  }
  func.func @transform_2(%arg0: i32) -> (i32, i32) {
    %c0_i32 = arith.constant 0 : i32
    %c0_i32_0 = arith.constant 0 : i32
    %c0_i32_1 = arith.constant 0 : i32
    return %c0_i32, %c0_i32_0 : i32, i32
  }
}

</mosaic_0001>

<llo_original>
// kernel: tpu_custom_call.1
$region0: #{tpu_custom_call.1}
  #allocation0 [shape = 'u32[]', space=smem, size = 0x4, offset = 0x4, fixed_abs, tag = 'smem constant byte address 0x4 - core index']
  #allocation1 [shape = 'u32[144,128]{1,0:T(1,128)}', space=vmem, size = 0x12000, scoped, tag = 'internal scratch']
  #allocation2 [shape = 'f32[1,1]{1,0:T(1,128)}', space=vmem, size = 0x200, scoped, tag = 'scratch operand']
  #allocation3 [shape = 'f32[1,1]{1,0:T(1,128)}', space=vmem, size = 0x200, scoped, tag = 'scratch operand']
  %s0 = inlined_call_operand.hbm [shape: f32[1,1024], index: 0, kind: input, shape index: {}]
  %s1 = inlined_call_operand.hbm [shape: f32[1,128], index: 1, kind: output, shape index: {0}]
  %s2 = inlined_call_operand.hbm [shape: f32[1,128], index: 2, kind: output, shape index: {1}]
  %3 = xla_tuple %s1, %s2
  %s4 = sld [smem:[#allocation0]]
  $region34: #{tpu_custom_call.1} parent=0
    _
  %s6 = ssub.s32 1, %s4
  %s7 = scalar_select 0, %s6, %s4
  $region1: #{tpu_custom_call.1} parent=0
    #allocation4 [shape = 'u8[4096]{0}', space=vmem, size = 0x1000, scoped, tag = 'input window, operand 0, single buffered']
    #allocation5 [shape = 's32[1]{0}', space=sflag, size = 0x4, scoped, tag = 'scoped memory for tpu_custom_call.1']
    #allocation6 [shape = 's32[1]{0}', space=sflag, size = 0x4, scoped, tag = 'scoped memory for tpu_custom_call.1']
    #allocation7 [shape = 'u8[512]{0}', space=vmem, size = 0x400, scoped, tag = 'output window, operand 0, single buffered']
    #allocation8 [shape = 'u8[512]{0}', space=vmem, size = 0x400, scoped, tag = 'output window, operand 1, single buffered']
    #allocation9 [shape = 's32[1]{0}', space=sflag, size = 0x4, scoped, tag = 'scoped memory for tpu_custom_call.1']
    %8 = vsyncpa [#allocation5], 0
    %9 = vsyncpa [#allocation6], 0
    %10 = vsyncpa [#allocation9], 0
    // Predicated region
    $region2: #{tpu_custom_call.1} parent=1 // pred_check
      _
    $region3: #{tpu_custom_call.1} parent=1 // pred_check_branch
      %12 = sbr.rel (0) target = $region5
    $region4: #{tpu_custom_call.1} parent=1 // pred_region
      %s14 = ssub.s32 128, 128
      %15 = vsyncadd [#allocation5], %s14
      %s17 = sshll.u32 [#allocation4], 4
      %s18 = int_to_ptr.vmem [resolvable:$true] %s17
      %20 = dma.hbm_to_vmem [thread:$0]  %s0, 128, %s18, [#allocation5]
    $region5: #{tpu_custom_call.1} parent=1 // pred_fallthru
      _
    // Predicated region
    $region6: #{tpu_custom_call.1} parent=1 // pred_check
      _
    $region7: #{tpu_custom_call.1} parent=1 // pred_check_branch
      %22 = sbr.rel (0) target = $region9
    $region8: #{tpu_custom_call.1} parent=1 // pred_region
      %23 = dma.done [#allocation5], 128
    $region9: #{tpu_custom_call.1} parent=1 // pred_fallthru
      _
    %p24 = scmp.eq.s32.totalorder 0, 0
    // Predicated region
    $region10: #{tpu_custom_call.1} parent=1 // pred_check
      %p25 = pneg %p24
    $region11: #{tpu_custom_call.1} parent=1 // pred_check_branch
      %27 = sbr.rel (%p25) target = $region13
    $region12: #{tpu_custom_call.1} parent=1 // pred_region
      %vm28 = vcmask 0
      %29 = vst.msk [vmem:[#allocation2] sm:$0x1] %vm28, 0.0
      %30 = vst.msk [vmem:[#allocation3] sm:$0x1] %vm28, 0.0
    $region13: #{tpu_custom_call.1} parent=1 // pred_fallthru
      _
    %v31 = vld [vmem:[#allocation4] sm:$0xff]
    %v32 = vld [vmem:[#allocation2] sm:$0x1]
    %v34 = vlaneseq
    %v35 = vshrl.u32 %v34, 7
    %v36 = vsub.s32 0, %v35
    %v37 = vrot.slane %v31, %v36
    %v38 = vlaneseq
    %v39 = vshrl.u32 %v38, 7
    %v40 = vsub.s32 1, %v39
    %v41 = vrot.slane %v31, %v40
    %v42 = vlaneseq
    %v43 = vshrl.u32 %v42, 7
    %v44 = vsub.s32 2, %v43
    %v45 = vrot.slane %v31, %v44
    %v46 = vlaneseq
    %v47 = vshrl.u32 %v46, 7
    %v48 = vsub.s32 3, %v47
    %v49 = vrot.slane %v31, %v48
    %v50 = vlaneseq
    %v51 = vshrl.u32 %v50, 7
    %v52 = vsub.s32 4, %v51
    %v53 = vrot.slane %v31, %v52
    %v54 = vlaneseq
    %v55 = vshrl.u32 %v54, 7
    %v56 = vsub.s32 5, %v55
    %v57 = vrot.slane %v31, %v56
    %v58 = vlaneseq
    %v59 = vshrl.u32 %v58, 7
    %v60 = vsub.s32 6, %v59
    %v61 = vrot.slane %v31, %v60
    %v62 = vlaneseq
    %v63 = vshrl.u32 %v62, 7
    %v64 = vsub.s32 7, %v63
    %v65 = vrot.slane %v31, %v64
    %vm74 = vcmask 1040384
    %v75 = vsel %vm74, %v37, 0.0
    %v76 = vsel %vm74, %v41, 0.0
    %v77 = vadd.f32 %v75, %v76
    %v78 = vsel %vm74, %v45, 0.0
    %v79 = vadd.f32 %v77, %v78
    %v80 = vsel %vm74, %v49, 0.0
    %v81 = vadd.f32 %v79, %v80
    %v82 = vsel %vm74, %v53, 0.0
    %v83 = vadd.f32 %v81, %v82
    %v84 = vsel %vm74, %v57, 0.0
    %v85 = vadd.f32 %v83, %v84
    %v86 = vsel %vm74, %v61, 0.0
    %v87 = vadd.f32 %v85, %v86
    %v88 = vsel %vm74, %v65, 0.0
    %v89 = vadd.f32 %v87, %v88
    %90 = vadd.xlane.f32.xlu0 %v89
    %v91 = vpop.xlane.xlu0 %90
    %v92 = vadd.f32 %v32, %v91
    %vm93 = vcmask 0
    %94 = vst.msk [vmem:[#allocation2] sm:$0x1] %vm93, %v92
    %v95 = vld [vmem:[#allocation3] sm:$0x1]
    %v96 = vmul.f32 %v31, %v31
    %v98 = vlaneseq
    %v99 = vshrl.u32 %v98, 7
    %v100 = vsub.s32 0, %v99
    %v101 = vrot.slane %v96, %v100
    %v102 = vlaneseq
    %v103 = vshrl.u32 %v102, 7
    %v104 = vsub.s32 1, %v103
    %v105 = vrot.slane %v96, %v104
    %v106 = vlaneseq
    %v107 = vshrl.u32 %v106, 7
    %v108 = vsub.s32 2, %v107
    %v109 = vrot.slane %v96, %v108
    %v110 = vlaneseq
    %v111 = vshrl.u32 %v110, 7
    %v112 = vsub.s32 3, %v111
    %v113 = vrot.slane %v96, %v112
    %v114 = vlaneseq
    %v115 = vshrl.u32 %v114, 7
    %v116 = vsub.s32 4, %v115
    %v117 = vrot.slane %v96, %v116
    %v118 = vlaneseq
    %v119 = vshrl.u32 %v118, 7
    %v120 = vsub.s32 5, %v119
    %v121 = vrot.slane %v96, %v120
    %v122 = vlaneseq
    %v123 = vshrl.u32 %v122, 7
    %v124 = vsub.s32 6, %v123
    %v125 = vrot.slane %v96, %v124
    %v126 = vlaneseq
    %v127 = vshrl.u32 %v126, 7
    %v128 = vsub.s32 7, %v127
    %v129 = vrot.slane %v96, %v128
    %v138 = vsel %vm74, %v101, 0.0
    %v139 = vsel %vm74, %v105, 0.0
    %v140 = vadd.f32 %v138, %v139
    %v141 = vsel %vm74, %v109, 0.0
    %v142 = vadd.f32 %v140, %v141
    %v143 = vsel %vm74, %v113, 0.0
    %v144 = vadd.f32 %v142, %v143
    %v145 = vsel %vm74, %v117, 0.0
    %v146 = vadd.f32 %v144, %v145
    %v147 = vsel %vm74, %v121, 0.0
    %v148 = vadd.f32 %v146, %v147
    %v149 = vsel %vm74, %v125, 0.0
    %v150 = vadd.f32 %v148, %v149
    %v151 = vsel %vm74, %v129, 0.0
    %v152 = vadd.f32 %v150, %v151
    %153 = vadd.xlane.f32.xlu0 %v152
    %v154 = vpop.xlane.xlu0 %153
    %v155 = vadd.f32 %v95, %v154
    %156 = vst.msk [vmem:[#allocation3] sm:$0x1] %vm93, %v155
    // Predicated region
    $region14: #{tpu_custom_call.1} parent=1 // pred_check
      %p157 = pneg %p24
    $region15: #{tpu_custom_call.1} parent=1 // pred_check_branch
      %159 = sbr.rel (%p157) target = $region17
    $region16: #{tpu_custom_call.1} parent=1 // pred_region
      %v160 = vld [vmem:[#allocation2] sm:$0x1]
      %162 = vset.pattern.permute.xlu0 0
      %163 = vperm.xlu0 %162, %v160
      %v164 = vpop.permute.xlu0 %163
      %v166 = vlaneseq
      %v167 = vshrl.u32 %v166, 7
      %v168 = vsub.s32 0, %v167
      %v169 = vrot.slane %v164, %v168
      %170 = vst [vmem:[#allocation7] sm:$0x1] %v169
      %v171 = vld [vmem:[#allocation3] sm:$0x1]
      %173 = vset.pattern.permute.xlu0 0
      %174 = vperm.xlu0 %173, %v171
      %v175 = vpop.permute.xlu0 %174
      %v177 = vlaneseq
      %v178 = vshrl.u32 %v177, 7
      %v179 = vsub.s32 0, %v178
      %v180 = vrot.slane %v175, %v179
      %181 = vst [vmem:[#allocation8] sm:$0x1] %v180
    $region17: #{tpu_custom_call.1} parent=1 // pred_fallthru
      _
    // Predicated region
    $region18: #{tpu_custom_call.1} parent=1 // pred_check
      _
    $region19: #{tpu_custom_call.1} parent=1 // pred_check_branch
      %183 = sbr.rel (0) target = $region21
    $region20: #{tpu_custom_call.1} parent=1 // pred_region
      %s185 = ssub.s32 16, 16
      %186 = vsyncadd [#allocation6], %s185
      %s188 = sshll.u32 [#allocation7], 4
      %s189 = int_to_ptr.vmem [resolvable:$true] %s188
      %191 = dma.vmem_to_hbm [thread:$0]  %s189, 16, %s1, [#allocation6]
    $region21: #{tpu_custom_call.1} parent=1 // pred_fallthru
      _
    // Predicated region
    $region22: #{tpu_custom_call.1} parent=1 // pred_check
      _
    $region23: #{tpu_custom_call.1} parent=1 // pred_check_branch
      %193 = sbr.rel (0) target = $region25
    $region24: #{tpu_custom_call.1} parent=1 // pred_region
      %s195 = ssub.s32 16, 16
      %196 = vsyncadd [#allocation9], %s195
      %s198 = sshll.u32 [#allocation8], 4
      %s199 = int_to_ptr.vmem [resolvable:$true] %s198
      %201 = dma.vmem_to_hbm [thread:$0]  %s199, 16, %s2, [#allocation9]
    $region25: #{tpu_custom_call.1} parent=1 // pred_fallthru
      _
    // Predicated region
    $region26: #{tpu_custom_call.1} parent=1 // pred_check
      _
    $region27: #{tpu_custom_call.1} parent=1 // pred_check_branch
      %203 = sbr.rel (0) target = $region29
    $region28: #{tpu_custom_call.1} parent=1 // pred_region
      %204 = dma.done [#allocation6], 16
    $region29: #{tpu_custom_call.1} parent=1 // pred_fallthru
      _
    // Predicated region
    $region30: #{tpu_custom_call.1} parent=1 // pred_check
      _
    $region31: #{tpu_custom_call.1} parent=1 // pred_check_branch
      %206 = sbr.rel (0) target = $region33
    $region32: #{tpu_custom_call.1} parent=1 // pred_region
      %207 = dma.done [#allocation9], 16
    $region33: #{tpu_custom_call.1} parent=1 // pred_fallthru
      _
    %208 = vsyncpa [#allocation5], 1
    %209 = vsyncpa [#allocation6], 1
    %210 = vsyncpa [#allocation9], 1

</llo_original>
